<compile_context>
chip_gen: v7x
topology: tpu7x:2x2x1
jax: 0.10.0
libtpu: 0.0.40
codegen_flags: <defaults>
</compile_context>

<pallas_src>
import jax
import jax.numpy as jnp
from jax.experimental import pallas as pl
from jax.experimental.pallas import tpu as pltpu


def _round_up(x, m):
    return (x + m - 1) // m * m


def _vmem_capacity_bytes():
    try:
        return int(pltpu.get_tpu_info().vmem_capacity_bytes)
    except Exception:
        return 128 * 1024 * 1024


def _pick_t_sub(t_tile, u_p, target_rows=256):
    """Smallest divisor of t_tile (multiple of 8) with d*u_p >= target_rows."""
    for d in range(8, t_tile + 1, 8):
        if t_tile % d == 0 and d * u_p >= target_rows:
            return d
    return t_tile


def _pick_rows_chunk(total, target=256):
    """Smallest divisor of total (multiple of 8) >= target, else total."""
    for d in range(8, total + 1, 8):
        if total % d == 0 and d >= target:
            return d
    return total


# ----------------------------------------------------------------------------
# small linear projection kernel:  y[b, rows] = x[b, rows] @ W_t + bias
# ----------------------------------------------------------------------------
def _proj_kernel(x_ref, w_ref, b_ref, o_ref):
    # x_ref: (1, rT, F)   w_ref: (F, Jp)   b_ref: (1, Jp)   o_ref: (1, rT, Jp)
    x = x_ref[0]
    o_ref[0] = (
        jnp.dot(x, w_ref[...], preferred_element_type=jnp.float32) + b_ref[...]
    ).astype(o_ref.dtype)


def _project(x, w_t, bias, r_tile, vmem_limit):
    """x: (B, R, F) f32 -> (B, R, Jp) f32 with y = x @ w_t + bias (row-tiled)."""
    B, R, F = x.shape
    Jp = w_t.shape[1]
    assert R % r_tile == 0
    return pl.pallas_call(
        _proj_kernel,
        out_shape=jax.ShapeDtypeStruct((B, R, Jp), jnp.float32),
        grid_spec=pltpu.PrefetchScalarGridSpec(
            num_scalar_prefetch=0,
            grid=(B, R // r_tile),
            in_specs=[
                pl.BlockSpec((1, r_tile, F), lambda b, r: (b, r, 0)),
                pl.BlockSpec((F, Jp), lambda b, r: (0, 0)),
                pl.BlockSpec((1, Jp), lambda b, r: (0, 0)),
            ],
            out_specs=pl.BlockSpec((1, r_tile, Jp), lambda b, r: (b, r, 0)),
        ),
        compiler_params=pltpu.CompilerParams(
            dimension_semantics=("parallel", "parallel"),
            vmem_limit_bytes=vmem_limit,
        ),
    )(x, w_t, bias)


# ----------------------------------------------------------------------------
# lattice kernel
#   phase 1 (only at v == 0): h = tanh(enc_proj[:,None,:] + dec_proj[None,:,:])
#                             cached in a bf16 VMEM scratch for this (b, T tile)
#   phase 2 (every V tile)  : o = h @ Wo_tile + bo_tile      (bf16 MXU, f32 acc)
# grid = (B, T-tiles, V-tiles), V innermost / "arbitrary"
# ----------------------------------------------------------------------------
def _make_lattice_kernel(t_sub, m_chunk):
    def kernel(encp_ref, decp_ref, wo_ref, bo_ref, o_ref, h_ref):
        # encp_ref: (1, tT, Jp) f32   decp_ref: (1, Up, Jp) f32
        # wo_ref:   (Jp, tV)   bf16   bo_ref:   (1, tV)    f32
        # o_ref:    (1, tT*Up, tV)    bf16 (lane-dense)
        # h_ref:    (tT*Up, Jp)       bf16 VMEM scratch
        t_tile = encp_ref.shape[1]
        u_p = decp_ref.shape[1]
        j_p = decp_ref.shape[2]
        rows = t_tile * u_p
        n_fill = t_tile // t_sub
        n_mm = rows // m_chunk

        @pl.when(pl.program_id(2) == 0)
        def _():
            decp = decp_ref[0]                                   # (Up, Jp) f32

            def fill(i, carry):
                r0 = pl.multiple_of(i * t_sub, t_sub)
                e = encp_ref[0, pl.ds(r0, t_sub), :]             # (t_sub, Jp) f32
                h = jnp.tanh(e[:, None, :] + decp[None, :, :])   # f32 add + tanh
                o0 = pl.multiple_of(i * (t_sub * u_p), t_sub * u_p)
                h_ref[pl.ds(o0, t_sub * u_p), :] = (
                    h.reshape(t_sub * u_p, j_p).astype(h_ref.dtype))
                return carry

            jax.lax.fori_loop(0, n_fill, fill, 0, unroll=min(n_fill, 2))

        wo = wo_ref[...]                                         # (Jp, tV) bf16
        bo = bo_ref[...]                                         # (1, tV)  f32

        def mm(i, carry):
            r0 = pl.multiple_of(i * m_chunk, m_chunk)
            h2 = h_ref[pl.ds(r0, m_chunk), :]                    # bf16 MXU operand
            acc = jnp.dot(h2, wo, preferred_element_type=jnp.float32) + bo
            o_ref[0, pl.ds(r0, m_chunk), :] = acc.astype(o_ref.dtype)
            return carry

        jax.lax.fori_loop(0, n_mm, mm, 0, unroll=min(n_mm, 2))

    return kernel


# ----------------------------------------------------------------------------
# wrapper
# ----------------------------------------------------------------------------
def joint_network_pallas(encoder_out, decoder_out, params, *, out_dtype=jnp.bfloat16):
    """encoder_out (B,T,E) f32, decoder_out (B,U,D) f32 -> (B,T,U,V) out_dtype."""
    B, T, E = encoder_out.shape
    Bd, U, D = decoder_out.shape
    assert B == Bd
    We, be, Wd, Wo, bo = (params["W_enc"], params["b_enc"], params["W_dec"],
                          params["W_out"], params["b_out"])
    J = We.shape[0]
    V = Wo.shape[0]

    # ---- device-dependent tile / VMEM budget -------------------------------
    vmem_cap = _vmem_capacity_bytes()
    if vmem_cap <= 64 * 1024 * 1024:           # v7x: 64 MiB per TensorCore
        vmem_limit = 40 * 1024 * 1024
        t_tile_target = 64
        tv_max = 256
    else:                                      # v5e / v6e: 128 MiB
        vmem_limit = 96 * 1024 * 1024
        t_tile_target = 128
        tv_max = 512

    Jp = _round_up(J, 128)                     # lane-dense joint dim (MXU K)
    Vp = _round_up(V, 128)                     # lane-dense vocab dim (MXU N / stores)
    Up = _round_up(U, 8)                       # sublane-aligned label dim
    out_bytes = jnp.dtype(out_dtype).itemsize

    tV = 128
    for cand in (512, 256):
        if cand <= tv_max and Vp % cand == 0:
            tV = cand
            break

    def _vmem_need(tT_, tV_):
        return (tT_ * Up * Jp * 2                    # h scratch (bf16)
                + 2 * tT_ * Up * tV_ * out_bytes     # output tile, double-buffered
                + 2 * tT_ * Jp * 4                   # enc_proj tile
                + 2 * Up * Jp * 4                    # dec_proj tile
                + 2 * Jp * tV_ * 2                   # Wo tile (bf16)
                + 2 * tV_ * 4)                       # bias tile

    tT = min(_round_up(T, 8), t_tile_target)
    while _vmem_need(tT, tV) > int(0.7 * vmem_limit) and tT > 8:
        tT = max(8, _round_up(tT // 2, 8))
    while _vmem_need(tT, tV) > int(0.7 * vmem_limit) and tV > 128:
        tV //= 2

    Tp = _round_up(T, tT)
    t_sub = _pick_t_sub(tT, Up)                 # fill-phase T sub-block
    m_chunk = _pick_rows_chunk(tT * Up)         # matmul-phase row chunk

    f32 = jnp.float32
    # weights: transpose to x @ W layout, zero-pad to lane-aligned sizes
    We_t = jnp.zeros((E, Jp), f32).at[:, :J].set(We.T.astype(f32))
    Wd_t = jnp.zeros((D, Jp), f32).at[:, :J].set(Wd.T.astype(f32))
    be_p = jnp.zeros((1, Jp), f32).at[:, :J].set(be.reshape(1, J).astype(f32))
    zero_b = jnp.zeros((1, Jp), f32)                        # mlp_dec has no bias
    Wo_t = jnp.zeros((Jp, Vp), jnp.bfloat16).at[:J, :V].set(Wo.T.astype(jnp.bfloat16))
    bo_p = jnp.zeros((1, Vp), f32).at[:, :V].set(bo.reshape(1, V).astype(f32))

    # pad activations along T / U (padded rows are sliced off at the end)
    enc_in = encoder_out.astype(f32)
    if Tp != T:
        enc_in = jnp.zeros((B, Tp, E), f32).at[:, :T, :].set(enc_in)
    dec_in = decoder_out.astype(f32)
    if Up != U:
        dec_in = jnp.zeros((B, Up, D), f32).at[:, :U, :].set(dec_in)

    # hoisted projections (tiny FLOPs; row-tiled so long T cannot blow VMEM)
    proj_vmem = min(vmem_limit, 32 * 1024 * 1024)
    enc_proj = _project(enc_in, We_t, be_p, tT, proj_vmem)       # (B, Tp, Jp) f32
    dec_proj = _project(dec_in, Wd_t, zero_b, Up, proj_vmem)     # (B, Up, Jp) f32

    # big lattice kernel: grid (B, T-tiles, V-tiles); V innermost so the cached
    # tanh activation (h scratch) is reused across the whole vocab.
    n_t_tiles = Tp // tT
    grid = (B, n_t_tiles, Vp // tV)
    out_flat = pl.pallas_call(
        _make_lattice_kernel(t_sub, m_chunk),
        out_shape=jax.ShapeDtypeStruct((B, Tp * Up, Vp), out_dtype),
        grid_spec=pltpu.PrefetchScalarGridSpec(
            num_scalar_prefetch=0,
            grid=grid,
            in_specs=[
                pl.BlockSpec((1, tT, Jp), lambda b, t, v: (b, t, 0)),   # enc_proj
                pl.BlockSpec((1, Up, Jp), lambda b, t, v: (b, 0, 0)),   # dec_proj
                pl.BlockSpec((Jp, tV), lambda b, t, v: (0, v)),         # Wo_t (bf16)
                pl.BlockSpec((1, tV), lambda b, t, v: (0, v)),          # bo
            ],
            out_specs=pl.BlockSpec((1, tT * Up, tV), lambda b, t, v: (b, t, v)),
            scratch_shapes=[pltpu.VMEM((tT * Up, Jp), jnp.bfloat16)],   # h cache
        ),
        compiler_params=pltpu.CompilerParams(
            dimension_semantics=("parallel", "parallel", "arbitrary"),
            vmem_limit_bytes=vmem_limit,
        ),
        cost_estimate=pl.CostEstimate(
            flops=2 * B * Tp * Up * Jp * Vp,
            transcendentals=B * Tp * Up * Jp,             # tanh computed once
            bytes_accessed=(
                out_bytes * B * Tp * Up * Vp              # output (dominant)
                + 4 * B * Tp * Jp                         # enc_proj read once
                + 4 * B * Up * Jp                         # dec_proj
                + 2 * Jp * Vp * B * n_t_tiles             # Wo re-read per T tile
            ),
        ),
    )(enc_proj, dec_proj, Wo_t, bo_p)

    return out_flat.reshape(B, Tp, Up, Vp)[:, :T, :U, :V]


# ----------------------------------------------------------------------------
# pure-JAX reference matching the PyTorch module exactly (f32)
# ----------------------------------------------------------------------------
def joint_network_ref(encoder_out, decoder_out, params):
    We, be, Wd, Wo, bo = (params["W_enc"], params["b_enc"], params["W_dec"],
                          params["W_out"], params["b_out"])
    enc = encoder_out[:, :, None, :]            # (B,T,1,E)
    dec = decoder_out[:, None, :, :]            # (B,1,U,D)
    h = jnp.tanh(enc @ We.T + be + dec @ Wd.T)  # (B,T,U,J)
    return h @ Wo.T + bo                        # (B,T,U,V)


def xavier_uniform(key, out_f, in_f):
    limit = (6.0 / (in_f + out_f)) ** 0.5
    return jax.random.uniform(key, (out_f, in_f), jnp.float32, -limit, limit)


if __name__ == "__main__":
    # small shapes consistent with the module
    B, T, U = 2, 8, 8
    E, D, J, V = 32, 32, 32, 16   # encoder_out_size, decoder_out_size, joint_space, vocab

    key = jax.random.PRNGKey(0)
    k_we, k_wd, k_wo, k_be, k_bo, k_x, k_y = jax.random.split(key, 7)

    params = {
        "W_enc": xavier_uniform(k_we, J, E),
        "b_enc": 0.1 * jax.random.normal(k_be, (J,), jnp.float32),
        "W_dec": xavier_uniform(k_wd, J, D),       # bias=False in the module
        "W_out": xavier_uniform(k_wo, V, J),
        "b_out": 0.1 * jax.random.normal(k_bo, (V,), jnp.float32),
    }

    encoder_out = jax.random.normal(k_x, (B, T, E), jnp.float32)
    decoder_out = jax.random.normal(k_y, (B, U, D), jnp.float32)

    out = joint_network_pallas(encoder_out, decoder_out, params)
    out = jax.block_until_ready(out)

    ref = joint_network_ref(encoder_out, decoder_out, params)
    assert out.shape == (B, T, U, V), out.shape
    # bf16 MXU operands + bf16 output -> loosened tolerance vs the f32 reference
    err = jnp.max(jnp.abs(out.astype(jnp.float32) - ref))
    assert jnp.allclose(out.astype(jnp.float32), ref, atol=5e-2, rtol=5e-2), float(err)

    print("KERNEL_OK")
</pallas_src>

<mosaic_0001>
module attributes {stable_mosaic.version = 11 : i64} {
  func.func @_proj_kernel(%arg0: i32, %arg1: i32, %arg2: memref<1x8x32xf32, #tpu.memory_space<vmem>>, %arg3: memref<32x128xf32, #tpu.memory_space<vmem>>, %arg4: memref<1x128xf32, #tpu.memory_space<vmem>>, %arg5: memref<1x8x128xf32, #tpu.memory_space<vmem>>) attributes {dimension_semantics = [#tpu.dimension_semantics<parallel>, #tpu.dimension_semantics<parallel>], iteration_bounds = array<i64: 2, 1>, scalar_prefetch = 0 : i64, scratch_operands = 0 : i64, tpu.core_type = #tpu.core_type<tc>, window_params = [{transform_indices = @transform_0, window_bounds = array<i64: 1, 8, 32>}, {pipeline_mode = #tpu.pipeline_mode<synchronous>, transform_indices = @transform_1, window_bounds = array<i64: 32, 128>}, {pipeline_mode = #tpu.pipeline_mode<synchronous>, transform_indices = @transform_2, window_bounds = array<i64: 1, 128>}, {transform_indices = @transform_3, window_bounds = array<i64: 1, 8, 128>}]} {
    %c0 = arith.constant 0 : index
    %c0_0 = arith.constant 0 : index
    %c0_1 = arith.constant 0 : index
    %0 = vector.load %arg2[%c0, %c0_0, %c0_1] : memref<1x8x32xf32, #tpu.memory_space<vmem>>, vector<1x8x32xf32>
    %1 = vector.shape_cast %0 : vector<1x8x32xf32> to vector<8x32xf32>
    %c0_2 = arith.constant 0 : index
    %c0_3 = arith.constant 0 : index
    %2 = vector.load %arg3[%c0_2, %c0_3] : memref<32x128xf32, #tpu.memory_space<vmem>>, vector<32x128xf32>
    %cst = arith.constant dense<0.000000e+00> : vector<8x128xf32>
    %3 = tpu.matmul %1, %2, %cst {dimension_numbers = #tpu.dot_dimension_numbers<[1], [0], [0], [1], [0, 0, 1, 1], [], []>} : vector<8x32xf32>, vector<32x128xf32>, vector<8x128xf32> -> vector<8x128xf32>
    %c0_4 = arith.constant 0 : index
    %c0_5 = arith.constant 0 : index
    %4 = vector.load %arg4[%c0_4, %c0_5] : memref<1x128xf32, #tpu.memory_space<vmem>>, vector<1x128xf32>
    %5 = vector.broadcast %4 : vector<1x128xf32> to vector<8x128xf32>
    %6 = arith.addf %3, %5 : vector<8x128xf32>
    %c0_6 = arith.constant 0 : index
    %c0_7 = arith.constant 0 : index
    %c0_8 = arith.constant 0 : index
    %7 = vector.load %arg5[%c0_6, %c0_7, %c0_8] : memref<1x8x128xf32, #tpu.memory_space<vmem>>, vector<1x8x128xf32>
    %8 = vector.shape_cast %7 : vector<1x8x128xf32> to vector<8x128xf32>
    %9 = vector.shape_cast %6 : vector<8x128xf32> to vector<1x8x128xf32>
    tpu.vector_store %arg5[%c0_6, %c0_7, %c0_8], %9 {strides = array<i32>} : memref<1x8x128xf32, #tpu.memory_space<vmem>>, vector<1x8x128xf32>,
    return
  }
  func.func @transform_0(%arg0: i32, %arg1: i32) -> (i32, i32, i32) {
    %c0_i32 = arith.constant 0 : i32
    %c0_i32_0 = arith.constant 0 : i32
    return %arg0, %arg1, %c0_i32 : i32, i32, i32
  }
  func.func @transform_1(%arg0: i32, %arg1: i32) -> (i32, i32) {
    %c0_i32 = arith.constant 0 : i32
    %c0_i32_0 = arith.constant 0 : i32
    %c0_i32_1 = arith.constant 0 : i32
    return %c0_i32, %c0_i32_0 : i32, i32
  }
  func.func @transform_2(%arg0: i32, %arg1: i32) -> (i32, i32) {
    %c0_i32 = arith.constant 0 : i32
    %c0_i32_0 = arith.constant 0 : i32
    %c0_i32_1 = arith.constant 0 : i32
    return %c0_i32, %c0_i32_0 : i32, i32
  }
  func.func @transform_3(%arg0: i32, %arg1: i32) -> (i32, i32, i32) {
    %c0_i32 = arith.constant 0 : i32
    %c0_i32_0 = arith.constant 0 : i32
    return %arg0, %arg1, %c0_i32 : i32, i32, i32
  }
}

</mosaic_0001>

<llo_original>
// kernel: tpu_custom_call.1
$region0: #{tpu_custom_call.1}
  #allocation0 [shape = 'u32[]', space=smem, size = 0x4, offset = 0x4, fixed_abs, tag = 'smem constant byte address 0x4 - core index']
  #allocation1 [shape = 'u32[144,128]{1,0:T(1,128)}', space=vmem, size = 0x12000, scoped, tag = 'internal scratch']
  %s0 = inlined_call_operand.hbm [shape: f32[2,8,32], index: 0, kind: input, shape index: {}]
  %s1 = inlined_call_operand.hbm [shape: f32[32,128], index: 1, kind: input, shape index: {}]
  %s2 = inlined_call_operand.vmem [shape: f32[1,128], index: 2, kind: input, shape index: {}]
  %s3 = inlined_call_operand.hbm [shape: f32[2,8,128], index: 3, kind: output, shape index: {}]
  %s4 = sld [smem:[#allocation0]]
  $region53: #{tpu_custom_call.1} parent=0
    _
  %s6 = ssub.s32 1, %s4
  %s7 = scalar_select 0, %s6, %s4
  $region1: #{tpu_custom_call.1} parent=0
    #allocation2 [shape = 'u8[8192]{0}', space=vmem, size = 0x2000, scoped, tag = 'input window, operand 0']
    #allocation3 [shape = 's32[2]{0}', space=sflag, size = 0x8, scoped, tag = 'scoped memory for tpu_custom_call.1']
    #allocation4 [shape = 's32[2]{0}', space=sflag, size = 0x8, scoped, tag = 'scoped memory for tpu_custom_call.1']
    #allocation5 [shape = 'u8[16384]{0}', space=vmem, size = 0x4000, scoped, tag = 'input window, operand 1, single buffered']
    #allocation6 [shape = 's32[1]{0}', space=sflag, size = 0x4, scoped, tag = 'scoped memory for tpu_custom_call.1']
    #allocation7 [shape = 'u8[8192]{0}', space=vmem, size = 0x2000, scoped, tag = 'output window, operand 0']
    %8 = vsyncpa [#allocation3], 0
    %s9 = scalar_lea.sflag [#allocation3], 1
    %10 = vsyncpa %s9, 0
    %11 = vsyncpa [#allocation6], 0
    %12 = vsyncpa [#allocation4], 0
    %s13 = scalar_lea.sflag [#allocation4], 1
    %14 = vsyncpa %s13, 0
    loop: start=0, step=1, limit=4
    $region2: #{tpu_custom_call.1} parent=1 // loop_pre_header
      _
    $region3: #{tpu_custom_call.1} parent=1 // loop_header
      %s16 = sphi 0, %s20
      %p17 = scmp.ge.s32.totalorder %s16, 4
      %s23 = sphi 0, %s35
      %s24 = sphi 0, %s31
      %s25 = sphi 0, %s23
      %s26 = sphi 0, %s24
      %s27 = sphi 0, %s25
      %s28 = sphi 0, %s26
      %s40 = sphi 0, %s42
      %s43 = sphi 0, %s40
      %s44 = sphi 0, %s43
      %s60 = sphi 0, %s44
      %s64 = sphi 0, %s64
      %s66 = sphi 0, %s64
      %s67 = sphi 0, %s66
      %s81 = sphi 0, %s67
      %s85 = sphi 0, %s85
      %s87 = sphi 0, %s85
      %s88 = sphi 0, %s87
      %s102 = sphi 0, %s88
      %s110 = sphi 0, %s112
      %s113 = sphi 0, %s110
      %s114 = sphi 0, %s113
      %s130 = sphi 0, %s114
    $region4: #{tpu_custom_call.1} parent=1 // loop_header_branch
      %19 = sbr.rel (%p17) target = $region8
    $region5: #{tpu_custom_call.1} parent=1 // loop_body
      %s21 = ssub.s32 %s16, 1
      %s22 = ssub.s32 %s16, 2
      %s29 = sadd.s32 1, %s24
      %p30 = scmp.ge.s32.totalorder %s29, 1
      %s31 = scalar_select %p30, 0, %s29
      %s32 = sadd.s32 1, %s23
      %s33 = scalar_select %p30, %s32, %s23
      %p34 = scmp.ge.s32.totalorder %s33, 2
      %s35 = scalar_select %p34, 0, %s33
      %s36 = ssub.s32 %s23, %s35
      %s37 = ssub.s32 %s24, %s31
      %s38 = sor.u32 %s36, %s37
      %p39 = scmp.eq.s32.totalorder %s38, 0
      %s41 = sadd.s32 %s40, 1
      %s42 = scalar_select %p39, %s40, %s41
      %p45 = pneg %p39
      %p46 = scmp.eq.s32.totalorder %s16, 1
      %p47 = por %p45, %p46
      %p48 = scmp.ne.s32.totalorder %s40, %s43
      %p49 = scmp.eq.s32.totalorder %s16, 0
      %p50 = por %p48, %p49
      %p51 = scmp.ne.s32.totalorder %s40, %s43
      %p52 = scmp.eq.s32.totalorder %s21, 1
      %p53 = por %p51, %p52
      %p54 = scmp.ne.s32.totalorder %s43, %s44
      %p55 = scmp.eq.s32.totalorder %s21, 0
      %p56 = por %p54, %p55
      %p57 = scmp.ne.s32.totalorder %s43, %s44
      %p58 = scmp.eq.s32.totalorder %s22, 1
      %p59 = por %p57, %p58
      %p61 = scmp.ne.s32.totalorder %s44, %s60
      %p62 = scmp.eq.s32.totalorder %s22, 0
      %p63 = por %p61, %p62
      %s65 = sadd.s32 %s64, 1
      %p68 = scmp.eq.s32.totalorder %s16, 1
      %p69 = scmp.ne.s32.totalorder %s64, %s66
      %p70 = scmp.eq.s32.totalorder %s16, 0
      %p71 = por %p69, %p70
      %p72 = scmp.ne.s32.totalorder %s64, %s66
      %p73 = scmp.eq.s32.totalorder %s21, 1
      %p74 = por %p72, %p73
      %p75 = scmp.ne.s32.totalorder %s66, %s67
      %p76 = scmp.eq.s32.totalorder %s21, 0
      %p77 = por %p75, %p76
      %p78 = scmp.ne.s32.totalorder %s66, %s67
      %p79 = scmp.eq.s32.totalorder %s22, 1
      %p80 = por %p78, %p79
      %p82 = scmp.ne.s32.totalorder %s67, %s81
      %p83 = scmp.eq.s32.totalorder %s22, 0
      %p84 = por %p82, %p83
      %s86 = sadd.s32 %s85, 1
      %p89 = scmp.eq.s32.totalorder %s16, 1
      %p90 = scmp.ne.s32.totalorder %s85, %s87
      %p91 = scmp.eq.s32.totalorder %s16, 0
      %p92 = por %p90, %p91
      %p93 = scmp.ne.s32.totalorder %s85, %s87
      %p94 = scmp.eq.s32.totalorder %s21, 1
      %p95 = por %p93, %p94
      %p96 = scmp.ne.s32.totalorder %s87, %s88
      %p97 = scmp.eq.s32.totalorder %s21, 0
      %p98 = por %p96, %p97
      %p99 = scmp.ne.s32.totalorder %s87, %s88
      %p100 = scmp.eq.s32.totalorder %s22, 1
      %p101 = por %p99, %p100
      %p103 = scmp.ne.s32.totalorder %s88, %s102
      %p104 = scmp.eq.s32.totalorder %s22, 0
      %p105 = por %p103, %p104
      %s106 = ssub.s32 %s23, %s35
      %s107 = ssub.s32 %s24, %s31
      %s108 = sor.u32 %s106, %s107
      %p109 = scmp.eq.s32.totalorder %s108, 0
      %s111 = sadd.s32 %s110, 1
      %s112 = scalar_select %p109, %s110, %s111
      %p115 = pneg %p109
      %p116 = scmp.eq.s32.totalorder %s16, 1
      %p117 = por %p115, %p116
      %p118 = scmp.ne.s32.totalorder %s110, %s113
      %p119 = scmp.eq.s32.totalorder %s16, 0
      %p120 = por %p118, %p119
      %p121 = scmp.ne.s32.totalorder %s110, %s113
      %p122 = scmp.eq.s32.totalorder %s21, 1
      %p123 = por %p121, %p122
      %p124 = scmp.ne.s32.totalorder %s113, %s114
      %p125 = scmp.eq.s32.totalorder %s21, 0
      %p126 = por %p124, %p125
      %p127 = scmp.ne.s32.totalorder %s113, %s114
      %p128 = scmp.eq.s32.totalorder %s22, 1
      %p129 = por %p127, %p128
      %p131 = scmp.ne.s32.totalorder %s114, %s130
      %p132 = scmp.eq.s32.totalorder %s22, 0
      %p133 = por %p131, %p132
      %p134 = scmp.le.s32.totalorder 1, %s16
      %p135 = scmp.lt.s32.totalorder %s16, 3
      %p136 = pnand %p134, %p135
      %p137 = pneg %p136
      // Predicated region
      $region9: #{tpu_custom_call.1} parent=5 // pred_check
        _
      $region10: #{tpu_custom_call.1} parent=5 // pred_check_branch
        %139 = sbr.rel (%p136) target = $region12
      $region11: #{tpu_custom_call.1} parent=5 // pred_region
        %s140 = ssub.s32 %s16, 1
        // Predicated region
        $region13: #{tpu_custom_call.1} parent=11 // pred_check
          %p141 = pneg %p77
        $region14: #{tpu_custom_call.1} parent=11 // pred_check_branch
          %143 = sbr.rel (%p141) target = $region16
        $region15: #{tpu_custom_call.1} parent=11 // pred_region
          %s145 = ssub.s32 512, 512
          %146 = vsyncadd [#allocation6], %s145
          %s147 = sshll.u32 [#allocation5], 4
          %s148 = int_to_ptr.vmem [resolvable:$true] %s147
          %153 = dma.hbm_to_vmem [thread:$0]  %s1, 512, %s148, [#allocation6], 128, 128, 8
        $region16: #{tpu_custom_call.1} parent=11 // pred_fallthru
          _
        // Predicated region
        $region17: #{tpu_custom_call.1} parent=11 // pred_check
          %p154 = pneg %p98
        $region18: #{tpu_custom_call.1} parent=11 // pred_check_branch
          %156 = sbr.rel (%p154) target = $region20
        $region19: #{tpu_custom_call.1} parent=11 // pred_region
          _
        $region20: #{tpu_custom_call.1} parent=11 // pred_fallthru
          _
      $region12: #{tpu_custom_call.1} parent=5 // pred_fallthru
        _
      %p157 = scmp.lt.s32.totalorder %s16, 2
      // Predicated region
      $region21: #{tpu_custom_call.1} parent=5 // pred_check
        %p158 = pneg %p157
      $region22: #{tpu_custom_call.1} parent=5 // pred_check_branch
        %160 = sbr.rel (%p158) target = $region24
      $region23: #{tpu_custom_call.1} parent=5 // pred_region
        // Predicated region
        $region25: #{tpu_custom_call.1} parent=23 // pred_check
          %p161 = pneg %p50
        $region26: #{tpu_custom_call.1} parent=23 // pred_check_branch
          %163 = sbr.rel (%p161) target = $region28
        $region27: #{tpu_custom_call.1} parent=23 // pred_region
          %s164 = sand.u32 %s40, 1
          %s165 = scalar_lea.sflag [#allocation3], %s164
          %s166 = sand.u32 %s40, 1
          %s167 = smul.addr %s166, 8
          %s168 = scalar_lea.vmem [#allocation2], %s167
          %s170 = ssub.s32 128, 128
          %171 = vsyncadd %s165, %s170
          %s172 = sadd.s32 %s24, %s23
          %s173 = smul.addr %s172, 128
          %s174 = scalar_lea.hbm %s0, %s173
          %s176 = sshll.u32 %s168, 4
          %s177 = int_to_ptr.vmem [resolvable:$true] %s176
          %179 = dma.hbm_to_vmem [thread:$0]  %s174, 128, %s177, %s165
        $region28: #{tpu_custom_call.1} parent=23 // pred_fallthru
          _
      $region24: #{tpu_custom_call.1} parent=5 // pred_fallthru
        _
      %p180 = scmp.le.s32.totalorder 1, %s16
      %p181 = scmp.lt.s32.totalorder %s16, 3
      %p182 = pnand %p180, %p181
      %p183 = pneg %p182
      // Predicated region
      $region29: #{tpu_custom_call.1} parent=5 // pred_check
        _
      $region30: #{tpu_custom_call.1} parent=5 // pred_check_branch
        %185 = sbr.rel (%p182) target = $region32
      $region31: #{tpu_custom_call.1} parent=5 // pred_region
        %s186 = ssub.s32 %s16, 1
        %s187 = sand.u32 %s43, 1
        %s188 = scalar_lea.sflag [#allocation3], %s187
        %s189 = sand.u32 %s43, 1
        %s190 = smul.addr %s189, 8
        %s191 = scalar_lea.vmem [#allocation2], %s190
        // Predicated region
        $region33: #{tpu_custom_call.1} parent=31 // pred_check
          %p192 = pneg %p56
        $region34: #{tpu_custom_call.1} parent=31 // pred_check_branch
          %194 = sbr.rel (%p192) target = $region36
        $region35: #{tpu_custom_call.1} parent=31 // pred_region
          %195 = dma.done %s188, 128
        $region36: #{tpu_custom_call.1} parent=31 // pred_fallthru
          _
        // Predicated region
        $region37: #{tpu_custom_call.1} parent=31 // pred_check
          %p196 = pneg %p77
        $region38: #{tpu_custom_call.1} parent=31 // pred_check_branch
          %198 = sbr.rel (%p196) target = $region40
        $region39: #{tpu_custom_call.1} parent=31 // pred_region
          %199 = dma.done [#allocation6], 512
        $region40: #{tpu_custom_call.1} parent=31 // pred_fallthru
          _
        %s200 = sand.u32 %s43, 1
        %s201 = scalar_lea.sflag [#allocation3], %s200
        %s202 = sand.u32 %s43, 1
        %s203 = smul.addr %s202, 8
        %s204 = scalar_lea.vmem [#allocation2], %s203
        %p205 = pneg %p56
        %p206 = pneg %p53
        %p207 = pneg %p77
        %p208 = pneg %p74
        %p209 = pneg %p98
        %p210 = pneg %p95
        %p211 = pneg %p126
        %p212 = pneg %p123
        %s213 = sand.u32 %s113, 1
        %s214 = scalar_lea.sflag [#allocation4], %s213
        %s215 = sand.u32 %s113, 1
        %s216 = smul.addr %s215, 8
        %s217 = scalar_lea.vmem [#allocation7], %s216
        %v218 = vld [vmem:[%s191] sm:$0xff]
        %v219 = vld [vmem:[#allocation5] sm:$0xff]
        %v220 = vld [vmem:[#allocation5 + $0x8] sm:$0xff]
        %v221 = vld [vmem:[#allocation5 + $0x10] sm:$0xff]
        %v222 = vld [vmem:[#allocation5 + $0x18] sm:$0xff]
        %v223 = vld [vmem:[%s2] sm:$0x1]
        %v225 = vlaneseq
        %v226 = vshrl.u32 %v225, 7
        %v227 = vsub.s32 0, %v226
        %v228 = vrot.slane %v223, %v227
        %vm230 = vcmask 261120
        %v232 = vsel %vm230, %v218, 0
        %234 = vmatprep.subr.mxu0 0.0
        %235 = vmatpush1.msra.mxu0 %v219
        %236 = vmatprep.subr.mxu0 0.0
        %237 = vmatpush1.msra.mxu0 %v220
        %238 = vmatprep.subr.mxu0 0.0
        %239 = vmatpush1.msra.mxu0 %v221
        %240 = vmatprep.subr.mxu0 0.0
        %241 = vmatpush1.msra.mxu0 %v222
        %242 = vmatprep.subr.mxu0 0.0
        %243 = vmatpush1.msra.mxu0 0.0
        %244 = vmatprep.subr.mxu0 0.0
        %245 = vmatpush1.msra.mxu0 0.0
        %246 = vmatprep.subr.mxu0 0.0
        %247 = vmatpush1.msra.mxu0 0.0
        %248 = vmatprep.subr.mxu0 0.0
        %249 = vmatpush1.msra.mxu0 0.0
        %250 = vmatprep.subr.mxu0 0.0
        %251 = vmatpush1.msra.mxu0 0.0
        %252 = vmatprep.subr.mxu0 0.0
        %253 = vmatpush1.msra.mxu0 0.0
        %254 = vmatprep.subr.mxu0 0.0
        %255 = vmatpush1.msra.mxu0 0.0
        %256 = vmatprep.subr.mxu0 0.0
        %257 = vmatpush1.msra.mxu0 0.0
        %258 = vmatprep.subr.mxu0 0.0
        %259 = vmatpush1.msra.mxu0 0.0
        %260 = vmatprep.subr.mxu0 0.0
        %261 = vmatpush1.msra.mxu0 0.0
        %262 = vmatprep.subr.mxu0 0.0
        %263 = vmatpush1.msra.mxu0 0.0
        %264 = vmatprep.subr.mxu0 0.0
        %265 = vmatpush1.msra.mxu0 0.0
        %266 = vmatprep.subr.mxu0 0.0
        %267 = vmatpush1.msra.mxu0 0.0
        %268 = vmatprep.subr.mxu0 0.0
        %269 = vmatpush1.msra.mxu0 0.0
        %270 = vmatprep.subr.mxu0 0.0
        %271 = vmatpush1.msra.mxu0 0.0
        %272 = vmatprep.subr.mxu0 0.0
        %273 = vmatpush1.msra.mxu0 0.0
        %274 = vmatprep.subr.mxu0 0.0
        %275 = vmatpush1.msra.mxu0 0.0
        %276 = vmatprep.subr.mxu0 0.0
        %277 = vmatpush1.msra.mxu0 0.0
        %278 = vmatprep.subr.mxu0 0.0
        %279 = vmatpush1.msra.mxu0 0.0
        %280 = vmatprep.subr.mxu0 0.0
        %281 = vmatpush1.msra.mxu0 0.0
        %282 = vmatprep.subr.mxu0 0.0
        %283 = vmatpush1.msra.mxu0 0.0
        %284 = vmatprep.subr.mxu0 0.0
        %285 = vmatpush1.msra.mxu0 0.0
        %286 = vmatprep.subr.mxu0 0.0
        %287 = vmatpush1.msra.mxu0 0.0
        %288 = vmatprep.subr.mxu0 0.0
        %289 = vmatpush1.msra.mxu0 0.0
        %290 = vmatprep.subr.mxu0 0.0
        %291 = vmatpush1.msra.mxu0 0.0
        %292 = vmatprep.subr.mxu0 0.0
        %293 = vmatpush1.msra.mxu0 0.0
        %294 = vmatprep.subr.mxu0 0.0
        %295 = vmatpush1.msra.mxu0 0.0
        %296 = vmatprep.subr.mxu0 0.0
        %297 = vmatpush1.msra.mxu0 0.0
        %298 = vmatprep.mubr.f32.mxu0 0.0
        %299 = vmatmul.mubr.f32.gmra.mrb[0].mxu0 %v232
        %v300 = vpop.f32.mrb[0].mxu0
        %v301 = vadd.f32 %v228, %v300
        %v302 = vpop.f32.mrb[0].mxu0
        %303 = vdwg.mxu0
        %304 = vst [vmem:[%s217] sm:$0xff] %v301
        %s305 = sand.u32 %s113, 1
        %s306 = scalar_lea.sflag [#allocation4], %s305
        %s307 = sand.u32 %s113, 1
        %s308 = smul.addr %s307, 8
        %s309 = scalar_lea.vmem [#allocation7], %s308
        // Predicated region
        $region41: #{tpu_custom_call.1} parent=31 // pred_check
          %p310 = pneg %p123
        $region42: #{tpu_custom_call.1} parent=31 // pred_check_branch
          %312 = sbr.rel (%p310) target = $region44
        $region43: #{tpu_custom_call.1} parent=31 // pred_region
          %s314 = ssub.s32 128, 128
          %315 = vsyncadd %s306, %s314
          %s316 = sadd.s32 %s26, %s25
          %s317 = smul.addr %s316, 128
          %s318 = scalar_lea.hbm %s3, %s317
          %s320 = sshll.u32 %s309, 4
          %s321 = int_to_ptr.vmem [resolvable:$true] %s320
          %323 = dma.vmem_to_hbm [thread:$0]  %s321, 128, %s318, %s306
        $region44: #{tpu_custom_call.1} parent=31 // pred_fallthru
          _
      $region32: #{tpu_custom_call.1} parent=5 // pred_fallthru
        _
      %p324 = scmp.le.s32.totalorder 2, %s16
      // Predicated region
      $region45: #{tpu_custom_call.1} parent=5 // pred_check
        %p325 = pneg %p324
      $region46: #{tpu_custom_call.1} parent=5 // pred_check_branch
        %327 = sbr.rel (%p325) target = $region48
      $region47: #{tpu_custom_call.1} parent=5 // pred_region
        %s328 = ssub.s32 %s16, 2
        // Predicated region
        $region49: #{tpu_custom_call.1} parent=47 // pred_check
          %p329 = pneg %p129
        $region50: #{tpu_custom_call.1} parent=47 // pred_check_branch
          %331 = sbr.rel (%p329) target = $region52
        $region51: #{tpu_custom_call.1} parent=47 // pred_region
          %s332 = sand.u32 %s114, 1
          %s333 = scalar_lea.sflag [#allocation4], %s332
          %s334 = sand.u32 %s114, 1
          %s335 = smul.addr %s334, 8
          %s336 = scalar_lea.vmem [#allocation7], %s335
          %337 = dma.done %s333, 128
        $region52: #{tpu_custom_call.1} parent=47 // pred_fallthru
          _
      $region48: #{tpu_custom_call.1} parent=5 // pred_fallthru
        _
    $region6: #{tpu_custom_call.1} parent=1 // loop_footer
      %s20 = sadd.s32 1, %s16
    $region7: #{tpu_custom_call.1} parent=1 // loop_footer_branch
      %15 = sbr.rel target = $region3
    $region8: #{tpu_custom_call.1} parent=1 // loop_exit
      _
    %338 = vsyncpa [#allocation3], 1
    %s339 = scalar_lea.sflag [#allocation3], 1
    %340 = vsyncpa %s339, 1
    %341 = vsyncpa [#allocation6], 1
    %342 = vsyncpa [#allocation4], 1
    %s343 = scalar_lea.sflag [#allocation4], 1
    %344 = vsyncpa %s343, 1

</llo_original>
